<compile_context>
chip_gen: v6e
topology: v6e:2x2x1
jax: 0.10.0
libtpu: 0.0.40
codegen_flags: <defaults>
</compile_context>

<pallas_src>
import functools

import jax
import jax.numpy as jnp
from jax.experimental import pallas as pl
from jax.experimental.pallas import tpu as pltpu

LANES = 128      # lane width of a vreg (last dim)
SUBLANES = 8     # sublane count of a vreg (second-to-last dim)


def _round_up(x, m):
    return ((x + m - 1) // m) * m


def _cdiv(a, b):
    return -(-a // b)


def mlp_kernel(xT_ref, w1T_ref, b1T_ref, w2T_ref, b2T_ref, oT_ref):
    # xT_ref : (obs, TB)      w1T_ref: (H, obs)      b1T_ref: (H, 1)
    # w2T_ref: (A_pad, H)     b2T_ref: (A_pad, 1)    oT_ref : (A_pad, TB)
    xT = xT_ref[...].astype(jnp.float32)          # mirrors x.float() in torch
    w1T = w1T_ref[...]
    obs = xT_ref.shape[0]

    # Layer 1 on the VPU: the contraction dim (obs = 2 for MountainCar) is
    # tiny, so broadcast FMAs beat an under-filled MXU matmul and overlap
    # with the layer-2 MXU push.  Result is h^T with batch on the lanes.
    acc = b1T_ref[...]                            # (H, 1) -> broadcasts to (H, TB)
    for k in range(obs):                          # static, tiny trip count
        acc = acc + w1T[:, k:k + 1] * xT[k:k + 1, :]
    hT = jnp.maximum(acc, 0.0)                    # ReLU, f32 on the VPU

    # Layer 2 on the MXU, f32 accumulate.  Output tile is (A_pad=8, TB) with
    # TB a multiple of 128, so the store is a lane-dense unmasked vst.
    yT = jnp.dot(w2T_ref[...], hT, preferred_element_type=jnp.float32)
    yT = yT + b2T_ref[...]
    oT_ref[...] = yT.astype(oT_ref.dtype)


def prepare_params(w1, b1, w2, b2):
    """One-time conversion to kernel-ready (transposed / sublane-padded) params."""
    # w1: (obs, H)  b1: (H,)  w2: (H, A)  b2: (A,)
    H, A = w2.shape
    A_pad = _round_up(max(A, SUBLANES), SUBLANES)     # pad actions to 8 sublanes
    w1T = jnp.asarray(w1, jnp.float32).T              # (H, obs)
    b1T = jnp.asarray(b1, jnp.float32).reshape(H, 1)  # (H, 1)
    w2T = jnp.zeros((A_pad, H), jnp.float32).at[:A, :].set(
        jnp.asarray(w2, jnp.float32).T)               # (A_pad, H)
    b2T = jnp.zeros((A_pad, 1), jnp.float32).at[:A, 0].set(
        jnp.asarray(b2, jnp.float32).reshape(A))      # (A_pad, 1)
    return w1T, b1T, w2T, b2T


@functools.partial(jax.jit, static_argnames=("n_actions", "block_b"))
def net_forward(x, w1T, b1T, w2T, b2T, *, n_actions, block_b=2048):
    B, obs = x.shape
    H = w1T.shape[0]
    A_pad = w2T.shape[0]

    # --- padding-aware, lane-aligned batch tiling -------------------------
    B128 = _round_up(B, LANES)              # batch rows live on the lane axis
    c = B128 // LANES                       # number of 128-row chunks
    cpt_max = max(block_b // LANES, 1)      # chunks per tile upper bound
    n_steps = _cdiv(c, cpt_max)
    if c >= 2:
        n_steps = max(n_steps, 2)           # let both v7x TensorCores work
    cpt = _cdiv(c, n_steps)                 # balanced chunks per tile
    n_steps = _cdiv(c, cpt)                 # drop empty trailing steps
    TB = cpt * LANES
    B_pad = TB * n_steps

    # Feature-major activations: (obs, B_pad), zero-padded batch columns.
    xT = jnp.zeros((obs, B_pad), jnp.float32).at[:, :B].set(
        x.T.astype(jnp.float32))

    flops = 2 * B_pad * (obs * H + H * A_pad) + B_pad * (H + A_pad)
    bytes_accessed = 4 * (obs * B_pad + H * obs + H + A_pad * H + A_pad
                          + A_pad * B_pad)

    # Per-step VMEM footprint (double-buffered xT + output tiles plus
    # resident weights) is ~100 KB at TB=2048, far below every scoped-VMEM
    # default, so no explicit vmem_limit_bytes is needed.
    oT = pl.pallas_call(
        mlp_kernel,
        out_shape=jax.ShapeDtypeStruct((A_pad, B_pad), jnp.float32),
        grid=(n_steps,),
        in_specs=[
            pl.BlockSpec((obs, TB), lambda i: (0, i)),    # x^T: tiled over batch
            pl.BlockSpec((H, obs), lambda i: (0, 0)),     # weights resident in VMEM
            pl.BlockSpec((H, 1), lambda i: (0, 0)),
            pl.BlockSpec((A_pad, H), lambda i: (0, 0)),
            pl.BlockSpec((A_pad, 1), lambda i: (0, 0)),
        ],
        out_specs=pl.BlockSpec((A_pad, TB), lambda i: (0, i)),
        compiler_params=pltpu.CompilerParams(
            dimension_semantics=("parallel",)),           # 2 TCs on v7x
        cost_estimate=pl.CostEstimate(flops=flops, transcendentals=0,
                                      bytes_accessed=bytes_accessed),
    )(xT, w1T, b1T, w2T, b2T)

    # Strip the zero-padded action sublanes / batch lanes, back to (B, A).
    return oT[:n_actions, :B].T


def init_params(key, obs_size, hidden_size, n_actions):
    # Deterministic init mimicking torch.nn.Linear default:
    # U(-1/sqrt(fan_in), 1/sqrt(fan_in)) for both weight and bias.
    k1, k2, k3, k4 = jax.random.split(key, 4)
    bound1 = 1.0 / jnp.sqrt(obs_size)
    bound2 = 1.0 / jnp.sqrt(hidden_size)
    # stored as [in, out] (transposed w.r.t. torch's [out, in])
    w1 = jax.random.uniform(k1, (obs_size, hidden_size), jnp.float32,
                            -bound1, bound1)
    b1 = jax.random.uniform(k2, (hidden_size,), jnp.float32, -bound1, bound1)
    w2 = jax.random.uniform(k3, (hidden_size, n_actions), jnp.float32,
                            -bound2, bound2)
    b2 = jax.random.uniform(k4, (n_actions,), jnp.float32, -bound2, bound2)
    return w1, b1, w2, b2


if __name__ == "__main__":
    # MountainCar-v0: obs_size = 2, n_actions = 3; pick hidden_size = 128.
    obs_size, hidden_size, n_actions = 2, 128, 3

    key = jax.random.PRNGKey(0)
    k_x, k_x2, k_p = jax.random.split(key, 3)
    w1, b1, w2, b2 = init_params(k_p, obs_size, hidden_size, n_actions)
    params = prepare_params(w1, b1, w2, b2)   # hoisted out of the forward path

    def ref_fn(x):
        return jnp.maximum(x @ w1 + b1[None, :], 0.0) @ w2 + b2[None, :]

    # Small inference-style batch (single grid step, TB = 128).
    x_small = jax.random.uniform(k_x, (8, obs_size), jnp.float32, -1.2, 0.6)
    out_small = net_forward(x_small, *params, n_actions=n_actions)
    jax.block_until_ready(out_small)
    assert out_small.shape == (8, n_actions)
    assert jnp.allclose(out_small, ref_fn(x_small), atol=1e-5, rtol=1e-5)

    # Larger, non-multiple batch to exercise tiling + padding (grid = 2 steps).
    x_big = jax.random.uniform(k_x2, (260, obs_size), jnp.float32, -1.2, 0.6)
    out_big = net_forward(x_big, *params, n_actions=n_actions)
    jax.block_until_ready(out_big)
    assert out_big.shape == (260, n_actions)
    assert jnp.allclose(out_big, ref_fn(x_big), atol=1e-5, rtol=1e-5)

    print("KERNEL_OK")
</pallas_src>

<mosaic_0001>
module attributes {stable_mosaic.version = 11 : i64} {
  func.func @mlp_kernel(%arg0: i32, %arg1: memref<2x128xf32, #tpu.memory_space<vmem>>, %arg2: memref<128x2xf32, #tpu.memory_space<vmem>>, %arg3: memref<128x1xf32, #tpu.memory_space<vmem>>, %arg4: memref<8x128xf32, #tpu.memory_space<vmem>>, %arg5: memref<8x1xf32, #tpu.memory_space<vmem>>, %arg6: memref<8x128xf32, #tpu.memory_space<vmem>>) attributes {dimension_semantics = [#tpu.dimension_semantics<parallel>], iteration_bounds = array<i64: 1>, scalar_prefetch = 0 : i64, scratch_operands = 0 : i64, tpu.core_type = #tpu.core_type<tc>, window_params = [{transform_indices = @transform_0, window_bounds = array<i64: 2, 128>}, {pipeline_mode = #tpu.pipeline_mode<synchronous>, transform_indices = @transform_1, window_bounds = array<i64: 128, 2>}, {pipeline_mode = #tpu.pipeline_mode<synchronous>, transform_indices = @transform_2, window_bounds = array<i64: 128, 1>}, {pipeline_mode = #tpu.pipeline_mode<synchronous>, transform_indices = @transform_3, window_bounds = array<i64: 8, 128>}, {pipeline_mode = #tpu.pipeline_mode<synchronous>, transform_indices = @transform_4, window_bounds = array<i64: 8, 1>}, {transform_indices = @transform_5, window_bounds = array<i64: 8, 128>}]} {
    %c0 = arith.constant 0 : index
    %c0_0 = arith.constant 0 : index
    %0 = vector.load %arg1[%c0, %c0_0] : memref<2x128xf32, #tpu.memory_space<vmem>>, vector<2x128xf32>
    %c0_1 = arith.constant 0 : index
    %c0_2 = arith.constant 0 : index
    %1 = vector.load %arg2[%c0_1, %c0_2] : memref<128x2xf32, #tpu.memory_space<vmem>>, vector<128x2xf32>
    %c0_3 = arith.constant 0 : index
    %c0_4 = arith.constant 0 : index
    %2 = vector.load %arg3[%c0_3, %c0_4] : memref<128x1xf32, #tpu.memory_space<vmem>>, vector<128x1xf32>
    %3 = vector.extract_strided_slice %1 {offsets = [0, 0], sizes = [128, 1], strides = [1, 1]} : vector<128x2xf32> to vector<128x1xf32>
    %4 = vector.extract_strided_slice %0 {offsets = [0, 0], sizes = [1, 128], strides = [1, 1]} : vector<2x128xf32> to vector<1x128xf32>
    %5 = vector.broadcast %3 : vector<128x1xf32> to vector<128x128xf32>
    %6 = vector.broadcast %4 : vector<1x128xf32> to vector<128x128xf32>
    %7 = arith.mulf %5, %6 : vector<128x128xf32>
    %8 = vector.broadcast %2 : vector<128x1xf32> to vector<128x128xf32>
    %9 = arith.addf %8, %7 : vector<128x128xf32>
    %10 = vector.extract_strided_slice %1 {offsets = [0, 1], sizes = [128, 1], strides = [1, 1]} : vector<128x2xf32> to vector<128x1xf32>
    %11 = vector.extract_strided_slice %0 {offsets = [1, 0], sizes = [1, 128], strides = [1, 1]} : vector<2x128xf32> to vector<1x128xf32>
    %12 = vector.broadcast %10 : vector<128x1xf32> to vector<128x128xf32>
    %13 = vector.broadcast %11 : vector<1x128xf32> to vector<128x128xf32>
    %14 = arith.mulf %12, %13 : vector<128x128xf32>
    %15 = arith.addf %9, %14 : vector<128x128xf32>
    %cst = arith.constant 0.000000e+00 : f32
    %16 = vector.broadcast %cst : f32 to vector<128x128xf32>
    %17 = arith.maximumf %15, %16 : vector<128x128xf32>
    %c0_5 = arith.constant 0 : index
    %c0_6 = arith.constant 0 : index
    %18 = vector.load %arg4[%c0_5, %c0_6] : memref<8x128xf32, #tpu.memory_space<vmem>>, vector<8x128xf32>
    %cst_7 = arith.constant dense<0.000000e+00> : vector<8x128xf32>
    %19 = tpu.matmul %18, %17, %cst_7 {dimension_numbers = #tpu.dot_dimension_numbers<[1], [0], [0], [1], [0, 0, 1, 1], [], []>} : vector<8x128xf32>, vector<128x128xf32>, vector<8x128xf32> -> vector<8x128xf32>
    %c0_8 = arith.constant 0 : index
    %c0_9 = arith.constant 0 : index
    %20 = vector.load %arg5[%c0_8, %c0_9] : memref<8x1xf32, #tpu.memory_space<vmem>>, vector<8x1xf32>
    %21 = vector.broadcast %20 : vector<8x1xf32> to vector<8x128xf32>
    %22 = arith.addf %19, %21 : vector<8x128xf32>
    %c0_10 = arith.constant 0 : index
    %c0_11 = arith.constant 0 : index
    %23 = vector.load %arg6[%c0_10, %c0_11] : memref<8x128xf32, #tpu.memory_space<vmem>>, vector<8x128xf32>
    tpu.vector_store %arg6[%c0_10, %c0_11], %22 {strides = array<i32>} : memref<8x128xf32, #tpu.memory_space<vmem>>, vector<8x128xf32>,
    return
  }
  func.func @transform_0(%arg0: i32) -> (i32, i32) {
    %c0_i32 = arith.constant 0 : i32
    %c0_i32_0 = arith.constant 0 : i32
    return %c0_i32, %arg0 : i32, i32
  }
  func.func @transform_1(%arg0: i32) -> (i32, i32) {
    %c0_i32 = arith.constant 0 : i32
    %c0_i32_0 = arith.constant 0 : i32
    %c0_i32_1 = arith.constant 0 : i32
    return %c0_i32, %c0_i32_0 : i32, i32
  }
  func.func @transform_2(%arg0: i32) -> (i32, i32) {
    %c0_i32 = arith.constant 0 : i32
    %c0_i32_0 = arith.constant 0 : i32
    %c0_i32_1 = arith.constant 0 : i32
    return %c0_i32, %c0_i32_0 : i32, i32
  }
  func.func @transform_3(%arg0: i32) -> (i32, i32) {
    %c0_i32 = arith.constant 0 : i32
    %c0_i32_0 = arith.constant 0 : i32
    %c0_i32_1 = arith.constant 0 : i32
    return %c0_i32, %c0_i32_0 : i32, i32
  }
  func.func @transform_4(%arg0: i32) -> (i32, i32) {
    %c0_i32 = arith.constant 0 : i32
    %c0_i32_0 = arith.constant 0 : i32
    %c0_i32_1 = arith.constant 0 : i32
    return %c0_i32, %c0_i32_0 : i32, i32
  }
  func.func @transform_5(%arg0: i32) -> (i32, i32) {
    %c0_i32 = arith.constant 0 : i32
    %c0_i32_0 = arith.constant 0 : i32
    return %c0_i32, %arg0 : i32, i32
  }
}

</mosaic_0001>

<llo_original>
// kernel: net_forward.1
$region0: #{net_forward.1}
  #allocation0 [shape = 'u32[]', space=smem, size = 0x4, offset = 0x4, fixed_abs, tag = 'smem constant byte address 0x4 - core index']
  #allocation1 [shape = 'u32[144,128]{1,0:T(1,128)}', space=vmem, size = 0x12000, scoped, tag = 'internal scratch']
  %s0 = inlined_call_operand.vmem [shape: f32[2,128], index: 0, kind: input, shape index: {}]
  %s1 = inlined_call_operand.vmem [shape: f32[128,2], index: 1, kind: input, shape index: {}]
  %s2 = inlined_call_operand.vmem [shape: f32[128,1], index: 2, kind: input, shape index: {}]
  %s3 = inlined_call_operand.vmem [shape: f32[8,128], index: 3, kind: input, shape index: {}]
  %s4 = inlined_call_operand.vmem [shape: f32[8,1], index: 4, kind: input, shape index: {}]
  %s5 = inlined_call_operand.vmem [shape: f32[8,128], index: 5, kind: output, shape index: {}]
  %s6 = sld [smem:[#allocation0]]
  $region30: #{net_forward.1} parent=0
    _
  %s8 = ssub.s32 1, %s6
  %s9 = scalar_select 0, %s8, %s6
  // Predicated region
  $region2: #{net_forward.1} parent=0 // pred_check
    _
  $region3: #{net_forward.1} parent=0 // pred_check_branch
    %11 = sbr.rel (0) target = $region5
  $region4: #{net_forward.1} parent=0 // pred_region
    _
  $region5: #{net_forward.1} parent=0 // pred_fallthru
    _
  // Predicated region
  $region6: #{net_forward.1} parent=0 // pred_check
    _
  $region7: #{net_forward.1} parent=0 // pred_check_branch
    %13 = sbr.rel (0) target = $region9
  $region8: #{net_forward.1} parent=0 // pred_region
    _
  $region9: #{net_forward.1} parent=0 // pred_fallthru
    _
  // Predicated region
  $region10: #{net_forward.1} parent=0 // pred_check
    _
  $region11: #{net_forward.1} parent=0 // pred_check_branch
    %15 = sbr.rel (0) target = $region13
  $region12: #{net_forward.1} parent=0 // pred_region
    _
  $region13: #{net_forward.1} parent=0 // pred_fallthru
    _
  // Predicated region
  $region14: #{net_forward.1} parent=0 // pred_check
    _
  $region15: #{net_forward.1} parent=0 // pred_check_branch
    %17 = sbr.rel (0) target = $region17
  $region16: #{net_forward.1} parent=0 // pred_region
    _
  $region17: #{net_forward.1} parent=0 // pred_fallthru
    _
  // Predicated region
  $region18: #{net_forward.1} parent=0 // pred_check
    _
  $region19: #{net_forward.1} parent=0 // pred_check_branch
    %19 = sbr.rel (0) target = $region21
  $region20: #{net_forward.1} parent=0 // pred_region
    _
  $region21: #{net_forward.1} parent=0 // pred_fallthru
    _
  %v20 = vld [vmem:[%s0] sm:$0x3]
  %v21 = vld [vmem:[%s1] sm:$0xff]
  %v22 = vld [vmem:[%s1 + $0x8] sm:$0xff]
  %v23 = vld [vmem:[%s1 + $0x10] sm:$0xff]
  %v24 = vld [vmem:[%s1 + $0x18] sm:$0xff]
  %v25 = vld [vmem:[%s1 + $0x20] sm:$0xff]
  %v26 = vld [vmem:[%s1 + $0x28] sm:$0xff]
  %v27 = vld [vmem:[%s1 + $0x30] sm:$0xff]
  %v28 = vld [vmem:[%s1 + $0x38] sm:$0xff]
  %v29 = vld [vmem:[%s1 + $0x40] sm:$0xff]
  %v30 = vld [vmem:[%s1 + $0x48] sm:$0xff]
  %v31 = vld [vmem:[%s1 + $0x50] sm:$0xff]
  %v32 = vld [vmem:[%s1 + $0x58] sm:$0xff]
  %v33 = vld [vmem:[%s1 + $0x60] sm:$0xff]
  %v34 = vld [vmem:[%s1 + $0x68] sm:$0xff]
  %v35 = vld [vmem:[%s1 + $0x70] sm:$0xff]
  %v36 = vld [vmem:[%s1 + $0x78] sm:$0xff]
  %v37 = vld [vmem:[%s2] sm:$0xff]
  %v38 = vld [vmem:[%s2 + $0x8] sm:$0xff]
  %v39 = vld [vmem:[%s2 + $0x10] sm:$0xff]
  %v40 = vld [vmem:[%s2 + $0x18] sm:$0xff]
  %v41 = vld [vmem:[%s2 + $0x20] sm:$0xff]
  %v42 = vld [vmem:[%s2 + $0x28] sm:$0xff]
  %v43 = vld [vmem:[%s2 + $0x30] sm:$0xff]
  %v44 = vld [vmem:[%s2 + $0x38] sm:$0xff]
  %v45 = vld [vmem:[%s2 + $0x40] sm:$0xff]
  %v46 = vld [vmem:[%s2 + $0x48] sm:$0xff]
  %v47 = vld [vmem:[%s2 + $0x50] sm:$0xff]
  %v48 = vld [vmem:[%s2 + $0x58] sm:$0xff]
  %v49 = vld [vmem:[%s2 + $0x60] sm:$0xff]
  %v50 = vld [vmem:[%s2 + $0x68] sm:$0xff]
  %v51 = vld [vmem:[%s2 + $0x70] sm:$0xff]
  %v52 = vld [vmem:[%s2 + $0x78] sm:$0xff]
  %54 = vset.pattern.permute.xlu0 0
  %55 = vperm.xlu0 %54, %v21
  %v56 = vpop.permute.xlu0 %55
  %59 = vset.pattern.permute.xlu0 0
  %60 = vperm.xlu0 %59, %v22
  %v61 = vpop.permute.xlu0 %60
  %64 = vset.pattern.permute.xlu0 0
  %65 = vperm.xlu0 %64, %v23
  %v66 = vpop.permute.xlu0 %65
  %69 = vset.pattern.permute.xlu0 0
  %70 = vperm.xlu0 %69, %v24
  %v71 = vpop.permute.xlu0 %70
  %74 = vset.pattern.permute.xlu0 0
  %75 = vperm.xlu0 %74, %v25
  %v76 = vpop.permute.xlu0 %75
  %79 = vset.pattern.permute.xlu0 0
  %80 = vperm.xlu0 %79, %v26
  %v81 = vpop.permute.xlu0 %80
  %84 = vset.pattern.permute.xlu0 0
  %85 = vperm.xlu0 %84, %v27
  %v86 = vpop.permute.xlu0 %85
  %89 = vset.pattern.permute.xlu0 0
  %90 = vperm.xlu0 %89, %v28
  %v91 = vpop.permute.xlu0 %90
  %94 = vset.pattern.permute.xlu0 0
  %95 = vperm.xlu0 %94, %v29
  %v96 = vpop.permute.xlu0 %95
  %99 = vset.pattern.permute.xlu0 0
  %100 = vperm.xlu0 %99, %v30
  %v101 = vpop.permute.xlu0 %100
  %104 = vset.pattern.permute.xlu0 0
  %105 = vperm.xlu0 %104, %v31
  %v106 = vpop.permute.xlu0 %105
  %109 = vset.pattern.permute.xlu0 0
  %110 = vperm.xlu0 %109, %v32
  %v111 = vpop.permute.xlu0 %110
  %114 = vset.pattern.permute.xlu0 0
  %115 = vperm.xlu0 %114, %v33
  %v116 = vpop.permute.xlu0 %115
  %119 = vset.pattern.permute.xlu0 0
  %120 = vperm.xlu0 %119, %v34
  %v121 = vpop.permute.xlu0 %120
  %124 = vset.pattern.permute.xlu0 0
  %125 = vperm.xlu0 %124, %v35
  %v126 = vpop.permute.xlu0 %125
  %129 = vset.pattern.permute.xlu0 0
  %130 = vperm.xlu0 %129, %v36
  %v131 = vpop.permute.xlu0 %130
  %v133 = vlaneseq
  %v134 = vshrl.u32 %v133, 7
  %v135 = vsub.s32 0, %v134
  %v136 = vrot.slane %v20, %v135
  %v137 = vmul.f32 %v56, %v136
  %v138 = vmul.f32 %v61, %v136
  %v139 = vmul.f32 %v66, %v136
  %v140 = vmul.f32 %v71, %v136
  %v141 = vmul.f32 %v76, %v136
  %v142 = vmul.f32 %v81, %v136
  %v143 = vmul.f32 %v86, %v136
  %v144 = vmul.f32 %v91, %v136
  %v145 = vmul.f32 %v96, %v136
  %v146 = vmul.f32 %v101, %v136
  %v147 = vmul.f32 %v106, %v136
  %v148 = vmul.f32 %v111, %v136
  %v149 = vmul.f32 %v116, %v136
  %v150 = vmul.f32 %v121, %v136
  %v151 = vmul.f32 %v126, %v136
  %v152 = vmul.f32 %v131, %v136
  %154 = vset.pattern.permute.xlu0 0
  %155 = vperm.xlu0 %154, %v37
  %v156 = vpop.permute.xlu0 %155
  %159 = vset.pattern.permute.xlu0 0
  %160 = vperm.xlu0 %159, %v38
  %v161 = vpop.permute.xlu0 %160
  %164 = vset.pattern.permute.xlu0 0
  %165 = vperm.xlu0 %164, %v39
  %v166 = vpop.permute.xlu0 %165
  %169 = vset.pattern.permute.xlu0 0
  %170 = vperm.xlu0 %169, %v40
  %v171 = vpop.permute.xlu0 %170
  %174 = vset.pattern.permute.xlu0 0
  %175 = vperm.xlu0 %174, %v41
  %v176 = vpop.permute.xlu0 %175
  %179 = vset.pattern.permute.xlu0 0
  %180 = vperm.xlu0 %179, %v42
  %v181 = vpop.permute.xlu0 %180
  %184 = vset.pattern.permute.xlu0 0
  %185 = vperm.xlu0 %184, %v43
  %v186 = vpop.permute.xlu0 %185
  %189 = vset.pattern.permute.xlu0 0
  %190 = vperm.xlu0 %189, %v44
  %v191 = vpop.permute.xlu0 %190
  %194 = vset.pattern.permute.xlu0 0
  %195 = vperm.xlu0 %194, %v45
  %v196 = vpop.permute.xlu0 %195
  %199 = vset.pattern.permute.xlu0 0
  %200 = vperm.xlu0 %199, %v46
  %v201 = vpop.permute.xlu0 %200
  %204 = vset.pattern.permute.xlu0 0
  %205 = vperm.xlu0 %204, %v47
  %v206 = vpop.permute.xlu0 %205
  %209 = vset.pattern.permute.xlu0 0
  %210 = vperm.xlu0 %209, %v48
  %v211 = vpop.permute.xlu0 %210
  %214 = vset.pattern.permute.xlu0 0
  %215 = vperm.xlu0 %214, %v49
  %v216 = vpop.permute.xlu0 %215
  %219 = vset.pattern.permute.xlu0 0
  %220 = vperm.xlu0 %219, %v50
  %v221 = vpop.permute.xlu0 %220
  %224 = vset.pattern.permute.xlu0 0
  %225 = vperm.xlu0 %224, %v51
  %v226 = vpop.permute.xlu0 %225
  %229 = vset.pattern.permute.xlu0 0
  %230 = vperm.xlu0 %229, %v52
  %v231 = vpop.permute.xlu0 %230
  %v233 = vadd.f32 %v156, %v137
  %v234 = vadd.f32 %v161, %v138
  %v235 = vadd.f32 %v166, %v139
  %v236 = vadd.f32 %v171, %v140
  %v237 = vadd.f32 %v176, %v141
  %v238 = vadd.f32 %v181, %v142
  %v239 = vadd.f32 %v186, %v143
  %v240 = vadd.f32 %v191, %v144
  %v241 = vadd.f32 %v196, %v145
  %v242 = vadd.f32 %v201, %v146
  %v243 = vadd.f32 %v206, %v147
  %v244 = vadd.f32 %v211, %v148
  %v245 = vadd.f32 %v216, %v149
  %v246 = vadd.f32 %v221, %v150
  %v247 = vadd.f32 %v226, %v151
  %v248 = vadd.f32 %v231, %v152
  %249 = vset.pattern.permute.xlu0 1
  %250 = vperm.xlu0 %249, %v21
  %v251 = vpop.permute.xlu0 %250
  %253 = vset.pattern.permute.xlu0 1
  %254 = vperm.xlu0 %253, %v22
  %v255 = vpop.permute.xlu0 %254
  %257 = vset.pattern.permute.xlu0 1
  %258 = vperm.xlu0 %257, %v23
  %v259 = vpop.permute.xlu0 %258
  %261 = vset.pattern.permute.xlu0 1
  %262 = vperm.xlu0 %261, %v24
  %v263 = vpop.permute.xlu0 %262
  %265 = vset.pattern.permute.xlu0 1
  %266 = vperm.xlu0 %265, %v25
  %v267 = vpop.permute.xlu0 %266
  %269 = vset.pattern.permute.xlu0 1
  %270 = vperm.xlu0 %269, %v26
  %v271 = vpop.permute.xlu0 %270
  %273 = vset.pattern.permute.xlu0 1
  %274 = vperm.xlu0 %273, %v27
  %v275 = vpop.permute.xlu0 %274
  %277 = vset.pattern.permute.xlu0 1
  %278 = vperm.xlu0 %277, %v28
  %v279 = vpop.permute.xlu0 %278
  %281 = vset.pattern.permute.xlu0 1
  %282 = vperm.xlu0 %281, %v29
  %v283 = vpop.permute.xlu0 %282
  %285 = vset.pattern.permute.xlu0 1
  %286 = vperm.xlu0 %285, %v30
  %v287 = vpop.permute.xlu0 %286
  %289 = vset.pattern.permute.xlu0 1
  %290 = vperm.xlu0 %289, %v31
  %v291 = vpop.permute.xlu0 %290
  %293 = vset.pattern.permute.xlu0 1
  %294 = vperm.xlu0 %293, %v32
  %v295 = vpop.permute.xlu0 %294
  %297 = vset.pattern.permute.xlu0 1
  %298 = vperm.xlu0 %297, %v33
  %v299 = vpop.permute.xlu0 %298
  %301 = vset.pattern.permute.xlu0 1
  %302 = vperm.xlu0 %301, %v34
  %v303 = vpop.permute.xlu0 %302
  %305 = vset.pattern.permute.xlu0 1
  %306 = vperm.xlu0 %305, %v35
  %v307 = vpop.permute.xlu0 %306
  %309 = vset.pattern.permute.xlu0 1
  %310 = vperm.xlu0 %309, %v36
  %v311 = vpop.permute.xlu0 %310
  %v313 = vlaneseq
  %v314 = vshrl.u32 %v313, 7
  %v315 = vsub.s32 1, %v314
  %v316 = vrot.slane %v20, %v315
  %v317 = vmul.f32 %v251, %v316
  %v318 = vmul.f32 %v255, %v316
  %v319 = vmul.f32 %v259, %v316
  %v320 = vmul.f32 %v263, %v316
  %v321 = vmul.f32 %v267, %v316
  %v322 = vmul.f32 %v271, %v316
  %v323 = vmul.f32 %v275, %v316
  %v324 = vmul.f32 %v279, %v316
  %v325 = vmul.f32 %v283, %v316
  %v326 = vmul.f32 %v287, %v316
  %v327 = vmul.f32 %v291, %v316
  %v328 = vmul.f32 %v295, %v316
  %v329 = vmul.f32 %v299, %v316
  %v330 = vmul.f32 %v303, %v316
  %v331 = vmul.f32 %v307, %v316
  %v332 = vmul.f32 %v311, %v316
  %v333 = vadd.f32 %v233, %v317
  %v334 = vadd.f32 %v234, %v318
  %v335 = vadd.f32 %v235, %v319
  %v336 = vadd.f32 %v236, %v320
  %v337 = vadd.f32 %v237, %v321
  %v338 = vadd.f32 %v238, %v322
  %v339 = vadd.f32 %v239, %v323
  %v340 = vadd.f32 %v240, %v324
  %v341 = vadd.f32 %v241, %v325
  %v342 = vadd.f32 %v242, %v326
  %v343 = vadd.f32 %v243, %v327
  %v344 = vadd.f32 %v244, %v328
  %v345 = vadd.f32 %v245, %v329
  %v346 = vadd.f32 %v246, %v330
  %v347 = vadd.f32 %v247, %v331
  %v348 = vadd.f32 %v248, %v332
  %v349 = vmax.f32 %v333, 0.0
  %v350 = vmax.f32 %v334, 0.0
  %v351 = vmax.f32 %v335, 0.0
  %v352 = vmax.f32 %v336, 0.0
  %v353 = vmax.f32 %v337, 0.0
  %v354 = vmax.f32 %v338, 0.0
  %v355 = vmax.f32 %v339, 0.0
  %v356 = vmax.f32 %v340, 0.0
  %v357 = vmax.f32 %v341, 0.0
  %v358 = vmax.f32 %v342, 0.0
  %v359 = vmax.f32 %v343, 0.0
  %v360 = vmax.f32 %v344, 0.0
  %v361 = vmax.f32 %v345, 0.0
  %v362 = vmax.f32 %v346, 0.0
  %v363 = vmax.f32 %v347, 0.0
  %v364 = vmax.f32 %v348, 0.0
  %v365 = vld [vmem:[%s3] sm:$0xff]
  %v366 = vld [vmem:[%s4] sm:$0xff]
  %368 = vset.pattern.permute.xlu0 0
  %369 = vperm.xlu0 %368, %v366
  %v370 = vpop.permute.xlu0 %369
  %372 = vmatprep.subr.mxu0 0.0
  %373 = vmatpush1.msra.mxu0 %v364
  %374 = vmatprep.subr.mxu0 0.0
  %375 = vmatpush1.msra.mxu0 %v363
  %376 = vmatprep.subr.mxu0 0.0
  %377 = vmatpush1.msra.mxu0 %v362
  %378 = vmatprep.subr.mxu0 0.0
  %379 = vmatpush1.msra.mxu0 %v361
  %380 = vmatprep.subr.mxu0 0.0
  %381 = vmatpush1.msra.mxu0 %v360
  %382 = vmatprep.subr.mxu0 0.0
  %383 = vmatpush1.msra.mxu0 %v359
  %384 = vmatprep.subr.mxu0 0.0
  %385 = vmatpush1.msra.mxu0 %v358
  %386 = vmatprep.subr.mxu0 0.0
  %387 = vmatpush1.msra.mxu0 %v357
  %388 = vmatprep.subr.mxu0 0.0
  %389 = vmatpush1.msra.mxu0 %v356
  %390 = vmatprep.subr.mxu0 0.0
  %391 = vmatpush1.msra.mxu0 %v355
  %392 = vmatprep.subr.mxu0 0.0
  %393 = vmatpush1.msra.mxu0 %v354
  %394 = vmatprep.subr.mxu0 0.0
  %395 = vmatpush1.msra.mxu0 %v353
  %396 = vmatprep.subr.mxu0 0.0
  %397 = vmatpush1.msra.mxu0 %v352
  %398 = vmatprep.subr.mxu0 0.0
  %399 = vmatpush1.msra.mxu0 %v351
  %400 = vmatprep.subr.mxu0 0.0
  %401 = vmatpush1.msra.mxu0 %v350
  %402 = vmatprep.subr.mxu0 0.0
  %403 = vmatpush1.msra.mxu0 %v349
  %404 = vmatprep.subr.mxu0 0.0
  %405 = vmatpush2.msra.mxu0 0.0
  %406 = vmatprep.subr.mxu0 0.0
  %407 = vmatpush2.msra.mxu0 0.0
  %408 = vmatprep.subr.mxu0 0.0
  %409 = vmatpush2.msra.mxu0 0.0
  %410 = vmatprep.subr.mxu0 0.0
  %411 = vmatpush2.msra.mxu0 0.0
  %412 = vmatprep.subr.mxu0 0.0
  %413 = vmatpush2.msra.mxu0 0.0
  %414 = vmatprep.subr.mxu0 0.0
  %415 = vmatpush2.msra.mxu0 0.0
  %416 = vmatprep.subr.mxu0 0.0
  %417 = vmatpush2.msra.mxu0 0.0
  %418 = vmatprep.subr.mxu0 0.0
  %419 = vmatpush2.msra.mxu0 0.0
  %420 = vmatprep.subr.mxu0 0.0
  %421 = vmatpush2.msra.mxu0 0.0
  %422 = vmatprep.subr.mxu0 0.0
  %423 = vmatpush2.msra.mxu0 0.0
  %424 = vmatprep.subr.mxu0 0.0
  %425 = vmatpush2.msra.mxu0 0.0
  %426 = vmatprep.subr.mxu0 0.0
  %427 = vmatpush2.msra.mxu0 0.0
  %428 = vmatprep.subr.mxu0 0.0
  %429 = vmatpush2.msra.mxu0 0.0
  %430 = vmatprep.subr.mxu0 0.0
  %431 = vmatpush2.msra.mxu0 0.0
  %432 = vmatprep.subr.mxu0 0.0
  %433 = vmatpush2.msra.mxu0 0.0
  %434 = vmatprep.subr.mxu0 0.0
  %435 = vmatpush2.msra.mxu0 0.0
  %436 = vmatprep.mubr.f32.mxu0 0.0
  %437 = vmatmul.mubr.f32.gmra.mxu0 %v365
  %v438 = vpop.f32.mrf.mxu0
  %v439 = vadd.f32 %v370, %v438
  %v440 = vpop.f32.mrf.mxu0
  %441 = vdwg.mxu0
  %442 = vst [vmem:[%s5] sm:$0xff] %v439
  // Predicated region
  $region22: #{net_forward.1} parent=0 // pred_check
    _
  $region23: #{net_forward.1} parent=0 // pred_check_branch
    %444 = sbr.rel (0) target = $region25
  $region24: #{net_forward.1} parent=0 // pred_region
    _
  $region25: #{net_forward.1} parent=0 // pred_fallthru
    _
  // Predicated region
  $region26: #{net_forward.1} parent=0 // pred_check
    _
  $region27: #{net_forward.1} parent=0 // pred_check_branch
    %446 = sbr.rel (0) target = $region29
  $region28: #{net_forward.1} parent=0 // pred_region
    _
  $region29: #{net_forward.1} parent=0 // pred_fallthru
    _

</llo_original>
